<compile_context>
chip_gen: v7x
topology: tpu7x:2x2x1
jax: 0.10.0
libtpu: 0.0.40
codegen_flags: <defaults>
</compile_context>

<pallas_src>
import functools

import jax
import jax.numpy as jnp
from jax.experimental import pallas as pl
from jax.experimental.pallas import tpu as pltpu

LANE = 128


def _round_up(x: int, m: int) -> int:
    return ((x + m - 1) // m) * m


def _make_kernel(margin: float):
    def kernel(s_ref, p_ref, n_ref, acc_ref):
        i = pl.program_id(1)

        @pl.when(i == 0)
        def _():
            acc_ref[...] = jnp.zeros_like(acc_ref)

        s = s_ref[...].astype(jnp.float32)
        p = p_ref[...].astype(jnp.float32)
        n = n_ref[...].astype(jnp.float32)

        d = s - p
        pos = d * d
        hinge = jnp.maximum(jnp.float32(margin) - jnp.abs(s - n), 0.0)
        neg = hinge * hinge

        # (sub, 8, 128) -> (8, 128): reduce over the leading axis only,
        # which lowers to plain elementwise vreg adds (VALU, no XLU).
        acc_ref[0, 0] += jnp.sum(pos, axis=0)
        acc_ref[0, 1] += jnp.sum(neg, axis=0)

    return kernel


@functools.partial(jax.jit, static_argnames=("margin", "block_rows"))
def contrastive_loss(selection_weights, positive_weights, negative_weights,
                     margin: float = 1.0, block_rows: int = 2048):
    total = selection_weights.size
    dtype = selection_weights.dtype

    # Sublane granularity: 8 rows for 32-bit, 16 for 16-bit, 32 for 8-bit.
    sub_mult = 8 * max(1, 4 // jnp.dtype(dtype).itemsize)

    rows = pl.cdiv(total, LANE)
    block_rows_eff = min(_round_up(block_rows, sub_mult),
                         _round_up(rows, sub_mult))

    num_blocks = pl.cdiv(rows, block_rows_eff)
    num_par = 2 if num_blocks % 2 == 0 and num_blocks >= 2 else 1
    steps = num_blocks // num_par

    padded_rows = num_blocks * block_rows_eff
    pad = padded_rows * LANE - total

    def prep(x):
        x = x.reshape(-1)                      # keep native dtype for the DMA
        if pad:
            x = jnp.pad(x, (0, pad))           # only when the size is ragged
        return x.reshape(padded_rows // 8, 8, LANE)

    s3d = prep(selection_weights)
    p3d = prep(positive_weights)
    n3d = prep(negative_weights)

    sub = block_rows_eff // 8
    in_spec = pl.BlockSpec((sub, 8, LANE), lambda j, i: (j * steps + i, 0, 0))

    partials = pl.pallas_call(
        _make_kernel(margin),
        out_shape=jax.ShapeDtypeStruct((num_par, 2, 8, LANE), jnp.float32),
        grid_spec=pltpu.PrefetchScalarGridSpec(
            num_scalar_prefetch=0,
            grid=(num_par, steps),
            in_specs=[in_spec, in_spec, in_spec],
            out_specs=pl.BlockSpec((1, 2, 8, LANE), lambda j, i: (j, 0, 0, 0)),
        ),
        compiler_params=pltpu.CompilerParams(
            dimension_semantics=("parallel", "arbitrary")),
    )(s3d, p3d, n3d)

    sums = jnp.sum(partials, axis=(0, 2, 3))   # -> (2,)
    pos_sum = sums[0]
    # Each zero-padded element (s = n = 0) contributes max(margin, 0)^2 to the
    # hinge sum; remove that exactly (valid for any sign of margin).
    neg_sum = sums[1] - jnp.float32(pad * max(float(margin), 0.0) ** 2)

    # mean(pos) + mean(neg), both over the unpadded element count.
    return (pos_sum + neg_sum) / jnp.float32(total)


def _reference(s, p, n, margin=1.0):
    pos_loss = jnp.mean((s - p) ** 2)
    neg_loss = jnp.mean(jnp.maximum(margin - jnp.abs(s - n), 0.0) ** 2)
    return pos_loss + neg_loss


if __name__ == "__main__":
    key = jax.random.PRNGKey(0)
    k1, k2, k3 = jax.random.split(key, 3)
    shape = (2, 4, 16, 16)  # [batch, channels, height, width]
    selection = jax.random.normal(k1, shape, dtype=jnp.float32)
    positive = jax.random.normal(k2, shape, dtype=jnp.float32)
    negative = jax.random.normal(k3, shape, dtype=jnp.float32)

    loss = contrastive_loss(selection, positive, negative, margin=1.0)
    loss = jax.block_until_ready(loss)

    ref = _reference(selection, positive, negative, margin=1.0)
    assert jnp.allclose(loss, ref, rtol=1e-5, atol=1e-6), (loss, ref)

    print("KERNEL_OK")
</pallas_src>

<mosaic_0001>
module attributes {stable_mosaic.version = 11 : i64} {
  func.func @kernel(%arg0: i32, %arg1: i32, %arg2: memref<2x8x128xf32, #tpu.memory_space<vmem>>, %arg3: memref<2x8x128xf32, #tpu.memory_space<vmem>>, %arg4: memref<2x8x128xf32, #tpu.memory_space<vmem>>, %arg5: memref<1x2x8x128xf32, #tpu.memory_space<vmem>>) attributes {dimension_semantics = [#tpu.dimension_semantics<parallel>, #tpu.dimension_semantics<arbitrary>], iteration_bounds = array<i64: 1, 1>, scalar_prefetch = 0 : i64, scratch_operands = 0 : i64, tpu.core_type = #tpu.core_type<tc>, window_params = [{transform_indices = @transform_0, window_bounds = array<i64: 2, 8, 128>}, {transform_indices = @transform_1, window_bounds = array<i64: 2, 8, 128>}, {transform_indices = @transform_2, window_bounds = array<i64: 2, 8, 128>}, {transform_indices = @transform_3, window_bounds = array<i64: 1, 2, 8, 128>}]} {
    %c0_i32 = arith.constant 0 : i32
    %0 = arith.cmpi eq, %arg1, %c0_i32 : i32
    %1 = arith.extui %0 : i1 to i32
    %c0_i32_0 = arith.constant 0 : i32
    %2 = arith.cmpi ne, %1, %c0_i32_0 : i32
    scf.if %2 {
      %cst_27 = arith.constant 0.000000e+00 : f32
      %29 = vector.broadcast %cst_27 : f32 to vector<1x2x8x128xf32>
      %c0_28 = arith.constant 0 : index
      %c0_29 = arith.constant 0 : index
      %c0_30 = arith.constant 0 : index
      %c0_31 = arith.constant 0 : index
      %30 = vector.load %arg5[%c0_28, %c0_29, %c0_30, %c0_31] : memref<1x2x8x128xf32, #tpu.memory_space<vmem>>, vector<1x2x8x128xf32>
      tpu.vector_store %arg5[%c0_28, %c0_29, %c0_30, %c0_31], %29 {strides = array<i32>} : memref<1x2x8x128xf32, #tpu.memory_space<vmem>>, vector<1x2x8x128xf32>,
    } else {
    }
    %c0 = arith.constant 0 : index
    %c0_1 = arith.constant 0 : index
    %c0_2 = arith.constant 0 : index
    %3 = vector.load %arg2[%c0, %c0_1, %c0_2] : memref<2x8x128xf32, #tpu.memory_space<vmem>>, vector<2x8x128xf32>
    %c0_3 = arith.constant 0 : index
    %c0_4 = arith.constant 0 : index
    %c0_5 = arith.constant 0 : index
    %4 = vector.load %arg3[%c0_3, %c0_4, %c0_5] : memref<2x8x128xf32, #tpu.memory_space<vmem>>, vector<2x8x128xf32>
    %c0_6 = arith.constant 0 : index
    %c0_7 = arith.constant 0 : index
    %c0_8 = arith.constant 0 : index
    %5 = vector.load %arg4[%c0_6, %c0_7, %c0_8] : memref<2x8x128xf32, #tpu.memory_space<vmem>>, vector<2x8x128xf32>
    %6 = arith.subf %3, %4 : vector<2x8x128xf32>
    %7 = arith.mulf %6, %6 : vector<2x8x128xf32>
    %8 = arith.subf %3, %5 : vector<2x8x128xf32>
    %9 = math.absf %8 : vector<2x8x128xf32>
    %cst = arith.constant 1.000000e+00 : f32
    %10 = vector.broadcast %cst : f32 to vector<2x8x128xf32>
    %11 = arith.subf %10, %9 : vector<2x8x128xf32>
    %cst_9 = arith.constant 0.000000e+00 : f32
    %12 = vector.broadcast %cst_9 : f32 to vector<2x8x128xf32>
    %13 = arith.maximumf %11, %12 : vector<2x8x128xf32>
    %14 = arith.mulf %13, %13 : vector<2x8x128xf32>
    %c0_10 = arith.constant 0 : index
    %c0_11 = arith.constant 0 : index
    %c0_12 = arith.constant 0 : index
    %c0_13 = arith.constant 0 : index
    %15 = vector.load %arg5[%c0_10, %c0_11, %c0_12, %c0_13] : memref<1x2x8x128xf32, #tpu.memory_space<vmem>>, vector<1x1x8x128xf32>
    %16 = vector.shape_cast %15 : vector<1x1x8x128xf32> to vector<8x128xf32>
    %cst_14 = arith.constant dense<0.000000e+00> : vector<8x128xf32>
    %17 = vector.multi_reduction <add>, %7, %cst_14 [0] : vector<2x8x128xf32> to vector<8x128xf32>
    %18 = arith.addf %16, %17 : vector<8x128xf32>
    %c0_15 = arith.constant 0 : index
    %c0_16 = arith.constant 0 : index
    %c0_17 = arith.constant 0 : index
    %c0_18 = arith.constant 0 : index
    %19 = vector.load %arg5[%c0_15, %c0_16, %c0_17, %c0_18] : memref<1x2x8x128xf32, #tpu.memory_space<vmem>>, vector<1x1x8x128xf32>
    %20 = vector.shape_cast %19 : vector<1x1x8x128xf32> to vector<8x128xf32>
    %21 = vector.shape_cast %18 : vector<8x128xf32> to vector<1x1x8x128xf32>
    tpu.vector_store %arg5[%c0_15, %c0_16, %c0_17, %c0_18], %21 {strides = array<i32>} : memref<1x2x8x128xf32, #tpu.memory_space<vmem>>, vector<1x1x8x128xf32>,
    %c0_19 = arith.constant 0 : index
    %c1 = arith.constant 1 : index
    %c0_20 = arith.constant 0 : index
    %c0_21 = arith.constant 0 : index
    %22 = vector.load %arg5[%c0_19, %c1, %c0_20, %c0_21] : memref<1x2x8x128xf32, #tpu.memory_space<vmem>>, vector<1x1x8x128xf32>
    %23 = vector.shape_cast %22 : vector<1x1x8x128xf32> to vector<8x128xf32>
    %cst_22 = arith.constant dense<0.000000e+00> : vector<8x128xf32>
    %24 = vector.multi_reduction <add>, %14, %cst_22 [0] : vector<2x8x128xf32> to vector<8x128xf32>
    %25 = arith.addf %23, %24 : vector<8x128xf32>
    %c0_23 = arith.constant 0 : index
    %c1_24 = arith.constant 1 : index
    %c0_25 = arith.constant 0 : index
    %c0_26 = arith.constant 0 : index
    %26 = vector.load %arg5[%c0_23, %c1_24, %c0_25, %c0_26] : memref<1x2x8x128xf32, #tpu.memory_space<vmem>>, vector<1x1x8x128xf32>
    %27 = vector.shape_cast %26 : vector<1x1x8x128xf32> to vector<8x128xf32>
    %28 = vector.shape_cast %25 : vector<8x128xf32> to vector<1x1x8x128xf32>
    tpu.vector_store %arg5[%c0_23, %c1_24, %c0_25, %c0_26], %28 {strides = array<i32>} : memref<1x2x8x128xf32, #tpu.memory_space<vmem>>, vector<1x1x8x128xf32>,
    return
  }
  func.func @transform_0(%arg0: i32, %arg1: i32) -> (i32, i32, i32) {
    %c1_i32 = arith.constant 1 : i32
    %0 = arith.muli %arg0, %c1_i32 : i32
    %1 = arith.addi %0, %arg1 : i32
    %c0_i32 = arith.constant 0 : i32
    %c0_i32_0 = arith.constant 0 : i32
    %c0_i32_1 = arith.constant 0 : i32
    return %1, %c0_i32, %c0_i32_0 : i32, i32, i32
  }
  func.func @transform_1(%arg0: i32, %arg1: i32) -> (i32, i32, i32) {
    %c1_i32 = arith.constant 1 : i32
    %0 = arith.muli %arg0, %c1_i32 : i32
    %1 = arith.addi %0, %arg1 : i32
    %c0_i32 = arith.constant 0 : i32
    %c0_i32_0 = arith.constant 0 : i32
    %c0_i32_1 = arith.constant 0 : i32
    return %1, %c0_i32, %c0_i32_0 : i32, i32, i32
  }
  func.func @transform_2(%arg0: i32, %arg1: i32) -> (i32, i32, i32) {
    %c1_i32 = arith.constant 1 : i32
    %0 = arith.muli %arg0, %c1_i32 : i32
    %1 = arith.addi %0, %arg1 : i32
    %c0_i32 = arith.constant 0 : i32
    %c0_i32_0 = arith.constant 0 : i32
    %c0_i32_1 = arith.constant 0 : i32
    return %1, %c0_i32, %c0_i32_0 : i32, i32, i32
  }
  func.func @transform_3(%arg0: i32, %arg1: i32) -> (i32, i32, i32, i32) {
    %c0_i32 = arith.constant 0 : i32
    %c0_i32_0 = arith.constant 0 : i32
    %c0_i32_1 = arith.constant 0 : i32
    %c0_i32_2 = arith.constant 0 : i32
    return %arg0, %c0_i32, %c0_i32_0, %c0_i32_1 : i32, i32, i32, i32
  }
}

</mosaic_0001>

<llo_original>
// kernel: contrastive_loss.1
$region0: #{contrastive_loss.1}
  #allocation0 [shape = 'u32[]', space=smem, size = 0x4, offset = 0x4, fixed_abs, tag = 'smem constant byte address 0x4 - core index']
  #allocation1 [shape = 'u32[144,128]{1,0:T(1,128)}', space=vmem, size = 0x12000, scoped, tag = 'internal scratch']
  %s0 = inlined_call_operand.vmem [shape: f32[2,8,128], index: 0, kind: input, shape index: {}]
  %s1 = inlined_call_operand.vmem [shape: f32[2,8,128], index: 1, kind: input, shape index: {}]
  %s2 = inlined_call_operand.vmem [shape: f32[2,8,128], index: 2, kind: input, shape index: {}]
  %s3 = inlined_call_operand.vmem [shape: f32[1,2,8,128], index: 3, kind: output, shape index: {}]
  %s4 = sld [smem:[#allocation0]]
  $region26: #{contrastive_loss.1} parent=0
    _
  %s6 = ssub.s32 1, %s4
  %s7 = scalar_select 0, %s6, %s4
  // Predicated region
  $region2: #{contrastive_loss.1} parent=0 // pred_check
    _
  $region3: #{contrastive_loss.1} parent=0 // pred_check_branch
    %9 = sbr.rel (0) target = $region5
  $region4: #{contrastive_loss.1} parent=0 // pred_region
    %s10 = sadd.s32 0, 0
    %s11 = smul.u32 2, %s10
    %p12 = scmp.lt.s32.totalorder %s11, 1
    %s13 = scalar_select %p12, %s11, 1
    %s14 = smul.addr %s13, 8
    %s15 = scalar_lea.vmem %s0, %s14
    %s16 = sadd.s32 0, 0
    %s17 = smul.u32 2, %s16
  $region5: #{contrastive_loss.1} parent=0 // pred_fallthru
    _
  // Predicated region
  $region6: #{contrastive_loss.1} parent=0 // pred_check
    _
  $region7: #{contrastive_loss.1} parent=0 // pred_check_branch
    %19 = sbr.rel (0) target = $region9
  $region8: #{contrastive_loss.1} parent=0 // pred_region
    %s20 = sadd.s32 0, 0
    %s21 = smul.u32 2, %s20
    %p22 = scmp.lt.s32.totalorder %s21, 1
    %s23 = scalar_select %p22, %s21, 1
    %s24 = smul.addr %s23, 8
    %s25 = scalar_lea.vmem %s1, %s24
    %s26 = sadd.s32 0, 0
    %s27 = smul.u32 2, %s26
  $region9: #{contrastive_loss.1} parent=0 // pred_fallthru
    _
  // Predicated region
  $region10: #{contrastive_loss.1} parent=0 // pred_check
    _
  $region11: #{contrastive_loss.1} parent=0 // pred_check_branch
    %29 = sbr.rel (0) target = $region13
  $region12: #{contrastive_loss.1} parent=0 // pred_region
    %s30 = sadd.s32 0, 0
    %s31 = smul.u32 2, %s30
    %p32 = scmp.lt.s32.totalorder %s31, 1
    %s33 = scalar_select %p32, %s31, 1
    %s34 = smul.addr %s33, 8
    %s35 = scalar_lea.vmem %s2, %s34
    %s36 = sadd.s32 0, 0
    %s37 = smul.u32 2, %s36
  $region13: #{contrastive_loss.1} parent=0 // pred_fallthru
    _
  %s38 = sadd.s32 0, 0
  %s39 = smul.u32 2, %s38
  %p40 = scmp.lt.s32.totalorder %s39, 1
  %s41 = scalar_select %p40, %s39, 1
  %s42 = smul.addr %s41, 8
  %s43 = scalar_lea.vmem %s0, %s42
  %s44 = sadd.s32 0, 0
  %s45 = smul.u32 2, %s44
  %p46 = scmp.lt.s32.totalorder %s45, 1
  %s47 = scalar_select %p46, %s45, 1
  %s48 = smul.addr %s47, 8
  %s49 = scalar_lea.vmem %s1, %s48
  %s50 = sadd.s32 0, 0
  %s51 = smul.u32 2, %s50
  %p52 = scmp.lt.s32.totalorder %s51, 1
  %s53 = scalar_select %p52, %s51, 1
  %s54 = smul.addr %s53, 8
  %s55 = scalar_lea.vmem %s2, %s54
  %s56 = sadd.s32 0, 0
  %s57 = smul.u32 2, %s56
  %p58 = scmp.lt.s32.totalorder %s57, 1
  %s59 = scalar_select %p58, %s57, 1
  %s60 = smul.addr %s59, 8
  %s61 = scalar_lea.vmem %s0, %s60
  %s62 = sadd.s32 0, 0
  %s63 = smul.u32 2, %s62
  %s64 = sadd.s32 0, 0
  %s65 = smul.u32 2, %s64
  %p66 = scmp.lt.s32.totalorder %s65, 1
  %s67 = scalar_select %p66, %s65, 1
  %s68 = smul.addr %s67, 8
  %s69 = scalar_lea.vmem %s1, %s68
  %s70 = sadd.s32 0, 0
  %s71 = smul.u32 2, %s70
  %s72 = sadd.s32 0, 0
  %s73 = smul.u32 2, %s72
  %p74 = scmp.lt.s32.totalorder %s73, 1
  %s75 = scalar_select %p74, %s73, 1
  %s76 = smul.addr %s75, 8
  %s77 = scalar_lea.vmem %s2, %s76
  %s78 = sadd.s32 0, 0
  %s79 = smul.u32 2, %s78
  %p80 = scmp.eq.s32.totalorder 0, 0
  // Predicated region
  $region14: #{contrastive_loss.1} parent=0 // pred_check
    %p81 = pneg %p80
  $region15: #{contrastive_loss.1} parent=0 // pred_check_branch
    %83 = sbr.rel (%p81) target = $region17
  $region16: #{contrastive_loss.1} parent=0 // pred_region
    %84 = vst [vmem:[%s3] sm:$0xff] 0.0
    %85 = vst [vmem:[%s3 + $0x8] sm:$0xff] 0.0
  $region17: #{contrastive_loss.1} parent=0 // pred_fallthru
    _
  %v86 = vld [vmem:[%s61] sm:$0xff]
  %v87 = vld [vmem:[%s61 + $0x8] sm:$0xff]
  %v88 = vld [vmem:[%s69] sm:$0xff]
  %v89 = vld [vmem:[%s69 + $0x8] sm:$0xff]
  %v90 = vld [vmem:[%s77] sm:$0xff]
  %v91 = vld [vmem:[%s77 + $0x8] sm:$0xff]
  %v92 = vsub.f32 %v86, %v88
  %v93 = vsub.f32 %v87, %v89
  %v94 = vmul.f32 %v92, %v92
  %v95 = vmul.f32 %v93, %v93
  %v96 = vsub.f32 %v86, %v90
  %v97 = vsub.f32 %v87, %v91
  %v98 = vand.u32 2147483647, %v96
  %v99 = vand.u32 2147483647, %v97
  %v100 = vsub.f32 1.0, %v98
  %v101 = vsub.f32 1.0, %v99
  %v102 = vmax.f32 %v100, 0.0
  %v103 = vmax.f32 %v101, 0.0
  %v104 = vmul.f32 %v102, %v102
  %v105 = vmul.f32 %v103, %v103
  %v106 = vld [vmem:[%s3] sm:$0xff]
  %v107 = vadd.f32 %v94, %v95
  %v108 = vadd.f32 %v106, %v107
  %109 = vst [vmem:[%s3] sm:$0xff] %v108
  %s110 = scalar_lea.vmem %s3, 8
  %v111 = vld [vmem:[%s110] sm:$0xff]
  %v112 = vadd.f32 %v104, %v105
  %v113 = vadd.f32 %v111, %v112
  %114 = vst [vmem:[%s110] sm:$0xff] %v113
  // Predicated region
  $region18: #{contrastive_loss.1} parent=0 // pred_check
    _
  $region19: #{contrastive_loss.1} parent=0 // pred_check_branch
    %116 = sbr.rel (0) target = $region21
  $region20: #{contrastive_loss.1} parent=0 // pred_region
    _
  $region21: #{contrastive_loss.1} parent=0 // pred_fallthru
    _
  // Predicated region
  $region22: #{contrastive_loss.1} parent=0 // pred_check
    _
  $region23: #{contrastive_loss.1} parent=0 // pred_check_branch
    %118 = sbr.rel (0) target = $region25
  $region24: #{contrastive_loss.1} parent=0 // pred_region
    _
  $region25: #{contrastive_loss.1} parent=0 // pred_fallthru
    _

</llo_original>
